<compile_context>
chip_gen: v5e
topology: v5e:2x2
jax: 0.10.0
libtpu: 0.0.40
codegen_flags: <defaults>
</compile_context>

<pallas_src>
import functools

import jax
import jax.numpy as jnp
from jax.experimental import pallas as pl
from jax.experimental.pallas import tpu as pltpu

X_DIM = 33
H_DIM1 = X_DIM // 2          # 16
H1 = H_DIM1 * 2              # 32  (fc1 out)
H2 = H_DIM1                  # 16  (fc2 out)
OUTPUT_SIZE = 11


def _t2c_kernel(x_ref, w1_ref, b1_ref, w2_ref, b2_ref, w3_ref, b3_ref, o_ref):
    # x_ref: (TB, X_DIM) -- native batch-major layout, any input dtype.
    x = x_ref[...].astype(jnp.float32)

    # fc1 + ReLU : (TB,33) @ (33,32) + (1,32)
    h1 = jnp.dot(x, w1_ref[...], preferred_element_type=jnp.float32) + b1_ref[...]
    h1 = jnp.maximum(h1, 0.0)

    # fc2 + ReLU : (TB,32) @ (32,16) + (1,16)
    h2 = jnp.dot(h1, w2_ref[...], preferred_element_type=jnp.float32) + b2_ref[...]
    h2 = jnp.maximum(h2, 0.0)

    # fc3 + ReLU : (TB,16) @ (16,11) + (1,11)   (spec applies ReLU to fc3 too)
    h3 = jnp.dot(h2, w3_ref[...], preferred_element_type=jnp.float32) + b3_ref[...]
    o_ref[...] = jnp.maximum(h3, 0.0).astype(o_ref.dtype)


def _round_up(n, m):
    return (n + m - 1) // m * m


def _choose_tile(batch, block_batch):
    # >=4 tiles for large batches (v7x 2-TC sharding + DMA overlap), never
    # below 512 rows (per-step overhead), never above block_batch (VMEM) or
    # the (sublane-rounded) batch itself.
    tb = max(512, _round_up(pl.cdiv(batch, 4), 8))
    return min(tb, block_batch, _round_up(batch, 8))


@functools.partial(jax.jit, static_argnames=("block_batch",))
def t2c_nn_forward(x, params, *, block_batch=8192):
    """x: (B, X_DIM) count-vector features (any dtype; f32/bf16/int8 all fine).

    `params` are kernel-layout: weights (in, out), biases (1, out) -- see
    `prepare_params` for the one-time conversion from torch layout.
    Returns (B, OUTPUT_SIZE) float32.
    """
    w1, b1, w2, b2, w3, b3 = params
    batch = x.shape[0]
    tb = _choose_tile(batch, block_batch)
    grid = (pl.cdiv(batch, tb),)

    full = lambda a: pl.BlockSpec(a.shape, lambda i: (0,) * a.ndim)

    param_bytes = sum(int(p.size) * p.dtype.itemsize for p in params)
    cost = pl.CostEstimate(
        flops=2 * batch * (X_DIM * H1 + H1 * H2 + H2 * OUTPUT_SIZE),
        transcendentals=0,
        bytes_accessed=batch * X_DIM * jnp.dtype(x.dtype).itemsize
        + batch * OUTPUT_SIZE * 4
        + param_bytes,
    )

    return pl.pallas_call(
        _t2c_kernel,
        out_shape=jax.ShapeDtypeStruct((batch, OUTPUT_SIZE), jnp.float32),
        grid=grid,
        in_specs=[
            pl.BlockSpec((tb, X_DIM), lambda i: (i, 0)),   # batch-tiled input
            full(w1), full(b1),                            # weights stay VMEM-resident
            full(w2), full(b2),
            full(w3), full(b3),
        ],
        out_specs=pl.BlockSpec((tb, OUTPUT_SIZE), lambda i: (i, 0)),
        compiler_params=pltpu.CompilerParams(
            dimension_semantics=("parallel",),
            vmem_limit_bytes=40 * 1024 * 1024,             # fits v7x 64 MiB, lifts v5e 16 MiB default
        ),
        cost_estimate=cost,
    )(x, w1, b1, w2, b2, w3, b3)


def init_params(key):
    """torch.nn.Linear-style init: U(-1/sqrt(fan_in), +1/sqrt(fan_in)).

    Torch-native layout: weights [out, in], biases [out].
    """
    dims = [(X_DIM, H1), (H1, H2), (H2, OUTPUT_SIZE)]
    params = []
    for fan_in, fan_out in dims:
        key, kw, kb = jax.random.split(key, 3)
        bound = 1.0 / jnp.sqrt(float(fan_in))
        w = jax.random.uniform(kw, (fan_out, fan_in), jnp.float32, -bound, bound)
        b = jax.random.uniform(kb, (fan_out,), jnp.float32, -bound, bound)
        params += [w, b]
    return tuple(params)


def prepare_params(torch_params):
    """One-time host-side conversion: [out,in]/[out] -> [in,out]/[1,out]."""
    w1, b1, w2, b2, w3, b3 = torch_params
    return (
        jnp.asarray(w1.T), b1.reshape(1, -1),
        jnp.asarray(w2.T), b2.reshape(1, -1),
        jnp.asarray(w3.T), b3.reshape(1, -1),
    )


def reference_forward(x, torch_params):
    w1, b1, w2, b2, w3, b3 = torch_params
    h = jnp.maximum(x @ w1.T + b1, 0.0)
    h = jnp.maximum(h @ w2.T + b2, 0.0)
    h = jnp.maximum(h @ w3.T + b3, 0.0)
    return h


if __name__ == "__main__":
    key = jax.random.PRNGKey(0)
    torch_params = init_params(key)
    params = prepare_params(torch_params)

    # Tiny batch (single ragged tile: tb=8 over 2 valid rows).
    key, kx = jax.random.split(key)
    x_small = jax.random.randint(kx, (2, X_DIM), 0, 5).astype(jnp.float32)
    out_small = jax.block_until_ready(t2c_nn_forward(x_small, params))
    ref_small = reference_forward(x_small, torch_params)
    assert out_small.shape == (2, OUTPUT_SIZE)
    assert jnp.allclose(out_small, ref_small, atol=1e-5, rtol=1e-5), "mismatch (B=2)"

    # Medium batch (single tile, no padding pass anywhere).
    key, kx = jax.random.split(key)
    x_med = jax.random.randint(kx, (300, X_DIM), 0, 5).astype(jnp.float32)
    out_med = jax.block_until_ready(t2c_nn_forward(x_med, params))
    ref_med = reference_forward(x_med, torch_params)
    assert out_med.shape == (300, OUTPUT_SIZE)
    assert jnp.allclose(out_med, ref_med, atol=1e-5, rtol=1e-5), "mismatch (B=300)"

    # Multi-tile grid with a ragged last block (tb=512, grid=3, 176 valid tail rows).
    key, kx = jax.random.split(key)
    x_big = jax.random.randint(kx, (1200, X_DIM), 0, 5).astype(jnp.float32)
    out_big = jax.block_until_ready(t2c_nn_forward(x_big, params))
    ref_big = reference_forward(x_big, torch_params)
    assert out_big.shape == (1200, OUTPUT_SIZE)
    assert jnp.allclose(out_big, ref_big, atol=1e-5, rtol=1e-5), "mismatch (B=1200)"

    print("KERNEL_OK")
</pallas_src>

<mosaic_0001>
module attributes {stable_mosaic.version = 11 : i64} {
  func.func @_t2c_kernel(%arg0: i32, %arg1: memref<8x33xf32, #tpu.memory_space<vmem>>, %arg2: memref<33x32xf32, #tpu.memory_space<vmem>>, %arg3: memref<1x32xf32, #tpu.memory_space<vmem>>, %arg4: memref<32x16xf32, #tpu.memory_space<vmem>>, %arg5: memref<1x16xf32, #tpu.memory_space<vmem>>, %arg6: memref<16x11xf32, #tpu.memory_space<vmem>>, %arg7: memref<1x11xf32, #tpu.memory_space<vmem>>, %arg8: memref<8x11xf32, #tpu.memory_space<vmem>>) attributes {dimension_semantics = [#tpu.dimension_semantics<parallel>], iteration_bounds = array<i64: 1>, scalar_prefetch = 0 : i64, scratch_operands = 0 : i64, tpu.core_type = #tpu.core_type<tc>, window_params = [{transform_indices = @transform_0, window_bounds = array<i64: 8, 33>}, {pipeline_mode = #tpu.pipeline_mode<synchronous>, transform_indices = @transform_1, window_bounds = array<i64: 33, 32>}, {pipeline_mode = #tpu.pipeline_mode<synchronous>, transform_indices = @transform_2, window_bounds = array<i64: 1, 32>}, {pipeline_mode = #tpu.pipeline_mode<synchronous>, transform_indices = @transform_3, window_bounds = array<i64: 32, 16>}, {pipeline_mode = #tpu.pipeline_mode<synchronous>, transform_indices = @transform_4, window_bounds = array<i64: 1, 16>}, {pipeline_mode = #tpu.pipeline_mode<synchronous>, transform_indices = @transform_5, window_bounds = array<i64: 16, 11>}, {pipeline_mode = #tpu.pipeline_mode<synchronous>, transform_indices = @transform_6, window_bounds = array<i64: 1, 11>}, {transform_indices = @transform_7, window_bounds = array<i64: 8, 11>}]} {
    %c0 = arith.constant 0 : index
    %c0_0 = arith.constant 0 : index
    %0 = vector.load %arg1[%c0, %c0_0] : memref<8x33xf32, #tpu.memory_space<vmem>>, vector<8x33xf32>
    %c0_1 = arith.constant 0 : index
    %c0_2 = arith.constant 0 : index
    %1 = vector.load %arg2[%c0_1, %c0_2] : memref<33x32xf32, #tpu.memory_space<vmem>>, vector<33x32xf32>
    %cst = arith.constant dense<0.000000e+00> : vector<8x32xf32>
    %2 = tpu.matmul %0, %1, %cst {dimension_numbers = #tpu.dot_dimension_numbers<[1], [0], [0], [1], [0, 0, 1, 1], [], []>} : vector<8x33xf32>, vector<33x32xf32>, vector<8x32xf32> -> vector<8x32xf32>
    %c0_3 = arith.constant 0 : index
    %c0_4 = arith.constant 0 : index
    %3 = vector.load %arg3[%c0_3, %c0_4] : memref<1x32xf32, #tpu.memory_space<vmem>>, vector<1x32xf32>
    %4 = vector.broadcast %3 : vector<1x32xf32> to vector<8x32xf32>
    %5 = arith.addf %2, %4 : vector<8x32xf32>
    %cst_5 = arith.constant 0.000000e+00 : f32
    %6 = vector.broadcast %cst_5 : f32 to vector<8x32xf32>
    %7 = arith.maximumf %5, %6 : vector<8x32xf32>
    %c0_6 = arith.constant 0 : index
    %c0_7 = arith.constant 0 : index
    %8 = vector.load %arg4[%c0_6, %c0_7] : memref<32x16xf32, #tpu.memory_space<vmem>>, vector<32x16xf32>
    %cst_8 = arith.constant dense<0.000000e+00> : vector<8x16xf32>
    %9 = tpu.matmul %7, %8, %cst_8 {dimension_numbers = #tpu.dot_dimension_numbers<[1], [0], [0], [1], [0, 0, 1, 1], [], []>} : vector<8x32xf32>, vector<32x16xf32>, vector<8x16xf32> -> vector<8x16xf32>
    %c0_9 = arith.constant 0 : index
    %c0_10 = arith.constant 0 : index
    %10 = vector.load %arg5[%c0_9, %c0_10] : memref<1x16xf32, #tpu.memory_space<vmem>>, vector<1x16xf32>
    %11 = vector.broadcast %10 : vector<1x16xf32> to vector<8x16xf32>
    %12 = arith.addf %9, %11 : vector<8x16xf32>
    %cst_11 = arith.constant 0.000000e+00 : f32
    %13 = vector.broadcast %cst_11 : f32 to vector<8x16xf32>
    %14 = arith.maximumf %12, %13 : vector<8x16xf32>
    %c0_12 = arith.constant 0 : index
    %c0_13 = arith.constant 0 : index
    %15 = vector.load %arg6[%c0_12, %c0_13] : memref<16x11xf32, #tpu.memory_space<vmem>>, vector<16x11xf32>
    %cst_14 = arith.constant dense<0.000000e+00> : vector<8x11xf32>
    %16 = tpu.matmul %14, %15, %cst_14 {dimension_numbers = #tpu.dot_dimension_numbers<[1], [0], [0], [1], [0, 0, 1, 1], [], []>} : vector<8x16xf32>, vector<16x11xf32>, vector<8x11xf32> -> vector<8x11xf32>
    %c0_15 = arith.constant 0 : index
    %c0_16 = arith.constant 0 : index
    %17 = vector.load %arg7[%c0_15, %c0_16] : memref<1x11xf32, #tpu.memory_space<vmem>>, vector<1x11xf32>
    %18 = vector.broadcast %17 : vector<1x11xf32> to vector<8x11xf32>
    %19 = arith.addf %16, %18 : vector<8x11xf32>
    %cst_17 = arith.constant 0.000000e+00 : f32
    %20 = vector.broadcast %cst_17 : f32 to vector<8x11xf32>
    %21 = arith.maximumf %19, %20 : vector<8x11xf32>
    %c0_18 = arith.constant 0 : index
    %c0_19 = arith.constant 0 : index
    %22 = vector.load %arg8[%c0_18, %c0_19] : memref<8x11xf32, #tpu.memory_space<vmem>>, vector<8x11xf32>
    tpu.vector_store %arg8[%c0_18, %c0_19], %21 {strides = array<i32>} : memref<8x11xf32, #tpu.memory_space<vmem>>, vector<8x11xf32>,
    return
  }
  func.func @transform_0(%arg0: i32) -> (i32, i32) {
    %c0_i32 = arith.constant 0 : i32
    %c0_i32_0 = arith.constant 0 : i32
    return %arg0, %c0_i32 : i32, i32
  }
  func.func @transform_1(%arg0: i32) -> (i32, i32) {
    %c0_i32 = arith.constant 0 : i32
    %c0_i32_0 = arith.constant 0 : i32
    %c0_i32_1 = arith.constant 0 : i32
    return %c0_i32, %c0_i32_0 : i32, i32
  }
  func.func @transform_2(%arg0: i32) -> (i32, i32) {
    %c0_i32 = arith.constant 0 : i32
    %c0_i32_0 = arith.constant 0 : i32
    %c0_i32_1 = arith.constant 0 : i32
    return %c0_i32, %c0_i32_0 : i32, i32
  }
  func.func @transform_3(%arg0: i32) -> (i32, i32) {
    %c0_i32 = arith.constant 0 : i32
    %c0_i32_0 = arith.constant 0 : i32
    %c0_i32_1 = arith.constant 0 : i32
    return %c0_i32, %c0_i32_0 : i32, i32
  }
  func.func @transform_4(%arg0: i32) -> (i32, i32) {
    %c0_i32 = arith.constant 0 : i32
    %c0_i32_0 = arith.constant 0 : i32
    %c0_i32_1 = arith.constant 0 : i32
    return %c0_i32, %c0_i32_0 : i32, i32
  }
  func.func @transform_5(%arg0: i32) -> (i32, i32) {
    %c0_i32 = arith.constant 0 : i32
    %c0_i32_0 = arith.constant 0 : i32
    %c0_i32_1 = arith.constant 0 : i32
    return %c0_i32, %c0_i32_0 : i32, i32
  }
  func.func @transform_6(%arg0: i32) -> (i32, i32) {
    %c0_i32 = arith.constant 0 : i32
    %c0_i32_0 = arith.constant 0 : i32
    %c0_i32_1 = arith.constant 0 : i32
    return %c0_i32, %c0_i32_0 : i32, i32
  }
  func.func @transform_7(%arg0: i32) -> (i32, i32) {
    %c0_i32 = arith.constant 0 : i32
    %c0_i32_0 = arith.constant 0 : i32
    return %arg0, %c0_i32 : i32, i32
  }
}

</mosaic_0001>

<llo_original>
// kernel: t2c_nn_forward.1
$region0: #{t2c_nn_forward.1}
  #allocation0 [shape = 'u32[]', space=smem, size = 0x4, offset = 0x4, fixed_abs, tag = 'smem constant byte address 0x4 - core index']
  #allocation1 [shape = 'u32[72,128]{1,0:T(1,128)}', space=vmem, size = 0x9000, scoped, tag = 'internal scratch']
  %s0 = inlined_call_operand.vmem [shape: f32[2,33], index: 0, kind: input, shape index: {}]
  %s1 = inlined_call_operand.vmem [shape: f32[33,32], index: 1, kind: input, shape index: {}]
  %s2 = inlined_call_operand.vmem [shape: f32[1,32], index: 2, kind: input, shape index: {}]
  %s3 = inlined_call_operand.vmem [shape: f32[32,16], index: 3, kind: input, shape index: {}]
  %s4 = inlined_call_operand.vmem [shape: f32[1,16], index: 4, kind: input, shape index: {}]
  %s5 = inlined_call_operand.vmem [shape: f32[16,11], index: 5, kind: input, shape index: {}]
  %s6 = inlined_call_operand.vmem [shape: f32[1,11], index: 6, kind: input, shape index: {}]
  %s7 = inlined_call_operand.hbm [shape: f32[2,11], index: 7, kind: output, shape index: {}]
  %s8 = sld [smem:[#allocation0]]
  $region38: #{t2c_nn_forward.1} parent=0
    _
  %s10 = ssub.s32 1, %s8
  %s11 = scalar_select 0, %s10, %s8
  $region1: #{t2c_nn_forward.1} parent=0
    #allocation2 [shape = 'u8[4096]{0}', space=vmem, size = 0x1000, scoped, tag = 'output window, operand 0, single buffered']
    #allocation3 [shape = 's32[1]{0}', space=sflag, size = 0x4, scoped, tag = 'scoped memory for t2c_nn_forward.1']
    %12 = vsyncpa [#allocation3], 0
    // Predicated region
    $region2: #{t2c_nn_forward.1} parent=1 // pred_check
      _
    $region3: #{t2c_nn_forward.1} parent=1 // pred_check_branch
      %14 = sbr.rel (0) target = $region5
    $region4: #{t2c_nn_forward.1} parent=1 // pred_region
      _
    $region5: #{t2c_nn_forward.1} parent=1 // pred_fallthru
      _
    // Predicated region
    $region6: #{t2c_nn_forward.1} parent=1 // pred_check
      _
    $region7: #{t2c_nn_forward.1} parent=1 // pred_check_branch
      %16 = sbr.rel (0) target = $region9
    $region8: #{t2c_nn_forward.1} parent=1 // pred_region
      _
    $region9: #{t2c_nn_forward.1} parent=1 // pred_fallthru
      _
    // Predicated region
    $region10: #{t2c_nn_forward.1} parent=1 // pred_check
      _
    $region11: #{t2c_nn_forward.1} parent=1 // pred_check_branch
      %18 = sbr.rel (0) target = $region13
    $region12: #{t2c_nn_forward.1} parent=1 // pred_region
      _
    $region13: #{t2c_nn_forward.1} parent=1 // pred_fallthru
      _
    // Predicated region
    $region14: #{t2c_nn_forward.1} parent=1 // pred_check
      _
    $region15: #{t2c_nn_forward.1} parent=1 // pred_check_branch
      %20 = sbr.rel (0) target = $region17
    $region16: #{t2c_nn_forward.1} parent=1 // pred_region
      _
    $region17: #{t2c_nn_forward.1} parent=1 // pred_fallthru
      _
    // Predicated region
    $region18: #{t2c_nn_forward.1} parent=1 // pred_check
      _
    $region19: #{t2c_nn_forward.1} parent=1 // pred_check_branch
      %22 = sbr.rel (0) target = $region21
    $region20: #{t2c_nn_forward.1} parent=1 // pred_region
      _
    $region21: #{t2c_nn_forward.1} parent=1 // pred_fallthru
      _
    // Predicated region
    $region22: #{t2c_nn_forward.1} parent=1 // pred_check
      _
    $region23: #{t2c_nn_forward.1} parent=1 // pred_check_branch
      %24 = sbr.rel (0) target = $region25
    $region24: #{t2c_nn_forward.1} parent=1 // pred_region
      _
    $region25: #{t2c_nn_forward.1} parent=1 // pred_fallthru
      _
    // Predicated region
    $region26: #{t2c_nn_forward.1} parent=1 // pred_check
      _
    $region27: #{t2c_nn_forward.1} parent=1 // pred_check_branch
      %26 = sbr.rel (0) target = $region29
    $region28: #{t2c_nn_forward.1} parent=1 // pred_region
      _
    $region29: #{t2c_nn_forward.1} parent=1 // pred_fallthru
      _
    %v27 = vld [vmem:[%s0] sm:$0xff]
    %v28 = vld [vmem:[%s1] sm:$0xff]
    %v29 = vld [vmem:[%s1 + $0x8] sm:$0xff]
    %v30 = vld [vmem:[%s1 + $0x10] sm:$0xff]
    %v31 = vld [vmem:[%s1 + $0x18] sm:$0xff]
    %v32 = vld [vmem:[%s1 + $0x20] sm:$0x1]
    %v33 = vld [vmem:[%s2] sm:$0x1]
    %v35 = vperm.slane %v33, 0
    %vm37 = vcmask 269312
    %v39 = vsel %vm37, %v27, 0
    %vm41 = vcmask 1040384
    %v43 = vsel %vm41, %v32, 0
    %45 = vmatpush.msra.mxu0 0.0
    %46 = vmatpush.msra.mxu0 0.0
    %47 = vmatpush.msra.mxu0 0.0
    %48 = vmatpush.msra.mxu0 0.0
    %49 = vmatpush.msra.mxu0 0.0
    %50 = vmatpush.msra.mxu0 0.0
    %51 = vmatpush.msra.mxu0 0.0
    %52 = vmatpush.msra.mxu0 0.0
    %53 = vmatpush.msra.mxu0 0.0
    %54 = vmatpush.msra.mxu0 0.0
    %55 = vmatpush.msra.mxu0 0.0
    %56 = vmatpush.msra.mxu0 %v43
    %57 = vmatpush.msra.mxu0 %v31
    %58 = vmatpush.msra.mxu0 %v30
    %59 = vmatpush.msra.mxu0 %v29
    %60 = vmatpush.msra.mxu0 %v28
    %61 = vmatmul.f32.gmra.mxu0 %v39
    %v62 = vpop.f32.mrf.mxu0
    %v63 = vadd.f32 %v35, %v62
    %64 = vdwg.mxu0
    %v65 = vmax.f32 %v63, 0.0
    %v66 = vld [vmem:[%s3] sm:$0xff]
    %v67 = vld [vmem:[%s3 + $0x8] sm:$0xff]
    %v68 = vld [vmem:[%s3 + $0x10] sm:$0xff]
    %v69 = vld [vmem:[%s3 + $0x18] sm:$0xff]
    %v70 = vld [vmem:[%s4] sm:$0x1]
    %v72 = vperm.slane %v70, 0
    %vm74 = vcmask 261120
    %v76 = vsel %vm74, %v65, 0
    %78 = vmatpush.msra.mxu0 0.0
    %79 = vmatpush.msra.mxu0 0.0
    %80 = vmatpush.msra.mxu0 0.0
    %81 = vmatpush.msra.mxu0 0.0
    %82 = vmatpush.msra.mxu0 0.0
    %83 = vmatpush.msra.mxu0 0.0
    %84 = vmatpush.msra.mxu0 0.0
    %85 = vmatpush.msra.mxu0 0.0
    %86 = vmatpush.msra.mxu0 0.0
    %87 = vmatpush.msra.mxu0 0.0
    %88 = vmatpush.msra.mxu0 0.0
    %89 = vmatpush.msra.mxu0 0.0
    %90 = vmatpush.msra.mxu0 %v69
    %91 = vmatpush.msra.mxu0 %v68
    %92 = vmatpush.msra.mxu0 %v67
    %93 = vmatpush.msra.mxu0 %v66
    %94 = vmatmul.f32.gmra.mxu0 %v76
    %v95 = vpop.f32.mrf.mxu0
    %v96 = vadd.f32 %v72, %v95
    %97 = vdwg.mxu0
    %v98 = vmax.f32 %v96, 0.0
    %v99 = vld [vmem:[%s5] sm:$0xff]
    %v100 = vld [vmem:[%s5 + $0x8] sm:$0xff]
    %v101 = vld [vmem:[%s6] sm:$0x1]
    %v103 = vperm.slane %v101, 0
    %vm105 = vcmask 130048
    %v107 = vsel %vm105, %v98, 0
    %109 = vmatpush.msra.mxu0 0.0
    %110 = vmatpush.msra.mxu0 0.0
    %111 = vmatpush.msra.mxu0 0.0
    %112 = vmatpush.msra.mxu0 0.0
    %113 = vmatpush.msra.mxu0 0.0
    %114 = vmatpush.msra.mxu0 0.0
    %115 = vmatpush.msra.mxu0 0.0
    %116 = vmatpush.msra.mxu0 0.0
    %117 = vmatpush.msra.mxu0 0.0
    %118 = vmatpush.msra.mxu0 0.0
    %119 = vmatpush.msra.mxu0 0.0
    %120 = vmatpush.msra.mxu0 0.0
    %121 = vmatpush.msra.mxu0 0.0
    %122 = vmatpush.msra.mxu0 0.0
    %123 = vmatpush.msra.mxu0 %v100
    %124 = vmatpush.msra.mxu0 %v99
    %125 = vmatmul.f32.gmra.mxu0 %v107
    %v126 = vpop.f32.mrf.mxu0
    %v127 = vadd.f32 %v103, %v126
    %128 = vdwg.mxu0
    %v129 = vmax.f32 %v127, 0.0
    %vm130 = vcmask 89088
    %131 = vst.msk [vmem:[#allocation2] sm:$0xff] %vm130, %v129
    // Predicated region
    $region30: #{t2c_nn_forward.1} parent=1 // pred_check
      _
    $region31: #{t2c_nn_forward.1} parent=1 // pred_check_branch
      %133 = sbr.rel (0) target = $region33
    $region32: #{t2c_nn_forward.1} parent=1 // pred_region
      %135 = vsyncadd [#allocation3], 96
      %s136 = sshll.u32 [#allocation2], 4
      %s137 = int_to_ptr.vmem [resolvable:$true] %s136
      %s138 = sshll.u32 %s7, 4
      %s139 = int_to_ptr.hbm [resolvable:$true] %s138
      %144 = dma.vmem_to_hbm [thread:$0]  %s137, 32, %s139, [#allocation3], 32, 32, 2
    $region33: #{t2c_nn_forward.1} parent=1 // pred_fallthru
      _
    // Predicated region
    $region34: #{t2c_nn_forward.1} parent=1 // pred_check
      _
    $region35: #{t2c_nn_forward.1} parent=1 // pred_check_branch
      %146 = sbr.rel (0) target = $region37
    $region36: #{t2c_nn_forward.1} parent=1 // pred_region
      %148 = dma.done [#allocation3], 128
    $region37: #{t2c_nn_forward.1} parent=1 // pred_fallthru
      _
    %149 = vsyncpa [#allocation3], 1

</llo_original>
